<compile_context>
chip_gen: v5e
topology: v5e:2x2
jax: 0.10.0
libtpu: 0.0.40
codegen_flags: <defaults>
</compile_context>

<pallas_src>
import jax
import jax.numpy as jnp
from jax.experimental import pallas as pl
from jax.experimental.pallas import tpu as pltpu


# --------------------------------------------------------------------------
# Kernel body
# --------------------------------------------------------------------------
def _mlp_kernel(x_ref, wg_ref, wu_ref, wd_ref, o_ref, acc_ref):
    # x_ref:  (ts, H)  bf16 activation tile (block index constant across k)
    # wg_ref: (H, ti)  bf16 gate-weight tile  (cols k*ti : (k+1)*ti of merged W)
    # wu_ref: (H, ti)  bf16 up-weight tile    (cols I + k*ti : I + (k+1)*ti)
    # wd_ref: (ti, H)  bf16 down-weight tile  (rows k*ti : (k+1)*ti)
    # o_ref:  (ts, H)  bf16 output tile (same block across k)
    # acc_ref:(ts, H)  fp32 accumulator scratch
    k = pl.program_id(1)

    @pl.when(k == 0)
    def _init():
        acc_ref[...] = jnp.zeros_like(acc_ref)

    x = x_ref[...]
    # gate / up partial projections for this intermediate tile (MXU, fp32 acc)
    g = jnp.dot(x, wg_ref[...], preferred_element_type=jnp.float32)   # (ts, ti)
    u = jnp.dot(x, wu_ref[...], preferred_element_type=jnp.float32)   # (ts, ti)
    # SiLU(gate) * up, cast to bf16 for the down matmul.
    # NOTE: the bf16 cast of h is a (standard) precision difference vs. a
    # pure fp32 reference; it is well within the test tolerance.
    h = (g * jax.nn.sigmoid(g) * u).astype(wd_ref.dtype)              # (ts, ti)
    # partial down projection, accumulated in fp32
    acc_ref[...] += jnp.dot(h, wd_ref[...], preferred_element_type=jnp.float32)

    @pl.when(k == pl.num_programs(1) - 1)
    def _finalize():
        o_ref[...] = acc_ref[...].astype(o_ref.dtype)


# --------------------------------------------------------------------------
# Tiling helpers
# --------------------------------------------------------------------------
def _vmem_capacity_bytes():
    """Physical VMEM per TensorCore; conservative 64 MiB fallback (v7x)."""
    try:
        cap = getattr(pltpu.get_tpu_info(), "vmem_capacity_bytes", None)
        if cap:
            return int(cap)
    except Exception:
        pass
    return 64 * 1024 * 1024


def _working_set_bytes(ts, ti, H):
    """Double-buffered VMEM working set for one grid step (bf16 tiles)."""
    x_b = 2 * ts * H * 2          # x tile (double-buffered)
    out_b = 2 * ts * H * 2        # output tile
    acc_b = ts * H * 4            # fp32 accumulator scratch
    w_b = 2 * (2 * H * ti + ti * H) * 2   # gate + up + down weight tiles
    return x_b + out_b + acc_b + w_b


def _largest_divisor_tile(I, preferred):
    """Largest multiple of 128 that divides I and is <= preferred.

    Precondition: I % 128 == 0 whenever I > preferred (guaranteed by caller),
    so the search always terminates with a valid tile (>= 128).
    """
    if I <= preferred:
        return I
    t = max(128, (preferred // 128) * 128)
    while t > 128 and I % t != 0:
        t -= 128
    return t


_TILE_CANDIDATES_TS = (1024, 512, 256, 128)
_TILE_CANDIDATES_TI = (1024, 512, 256, 128)


def _select_tiles(S, H, I, budget_bytes, seq_tile, int_tile):
    """Pick (ts, ti): biggest seq tile first (arithmetic intensity), then
    the biggest intermediate tile that still fits the VMEM budget."""
    ts_cands = (seq_tile,) if seq_tile is not None else _TILE_CANDIDATES_TS
    ti_cands = (int_tile,) if int_tile is not None else _TILE_CANDIDATES_TI
    chosen = None
    for ts_c in ts_cands:
        ts = S if S <= ts_c else max(8, (ts_c // 8) * 8)
        for ti_c in ti_cands:
            ti = _largest_divisor_tile(I, max(128, ti_c))
            chosen = (ts, ti)
            if _working_set_bytes(ts, ti, H) <= budget_bytes:
                return ts, ti
    return chosen  # nothing fit the budget: smallest candidate (best effort)


# --------------------------------------------------------------------------
# Wrapper
# --------------------------------------------------------------------------
def llama_fast_mlp(x, w_gate_up, w_down, *, seq_tile=None, int_tile=None):
    """x: [1, S, H] bf16 ; w_gate_up: [H, 2*I] bf16 (gate || up) ;
    w_down: [I, H] bf16.  Returns [S, H] bf16 (== forward_prefill).

    seq_tile / int_tile default to an auto-selection that maximizes the seq
    tile (arithmetic intensity ~= seq_tile FLOPs per weight byte) and then the
    intermediate tile, subject to the chip's VMEM capacity.
    """
    assert x.ndim == 3 and x.shape[0] == 1
    x2d = x[0]
    S, H = x2d.shape
    two_I = w_gate_up.shape[1]
    I = two_I // 2
    assert w_gate_up.shape == (H, two_I)
    assert w_down.shape == (I, H)

    # ---- weight handling: no HBM copies on the common (I % 128 == 0) path ----
    if I % 128 == 0:
        merged = True
        wg_arr = w_gate_up          # same HBM array passed twice; the "up"
        wu_arr = w_gate_up          # BlockSpec index_map is offset by n_k.
        wd_arr = w_down
        I_eff = I
    else:
        # TODO(synk): rare ragged-intermediate fallback; pads gate/up/down with
        # zeros (one-time HBM copies).  Zero columns contribute silu(0)*0 = 0.
        merged = False
        I_eff = ((I + 127) // 128) * 128
        pad = I_eff - I
        wg_arr = jnp.pad(w_gate_up[:, :I], ((0, 0), (0, pad)))
        wu_arr = jnp.pad(w_gate_up[:, I:], ((0, 0), (0, pad)))
        wd_arr = jnp.pad(w_down, ((0, pad), (0, 0)))

    # ---- tile selection & VMEM budget ----
    cap = _vmem_capacity_bytes()
    budget = int(cap * 0.85)                 # headroom for compiler scratch
    ts, ti = _select_tiles(S, H, I_eff, budget, seq_tile, int_tile)
    n_k = I_eff // ti
    n_i = pl.cdiv(S, ts)
    grid = (n_i, n_k)

    ws = _working_set_bytes(ts, ti, H)
    vmem_limit = min(max(32 * 1024 * 1024, ws + (8 << 20)), cap)

    if merged:
        up_map = lambda i, k, _nk=n_k: (0, k + _nk)    # offset into up half
    else:
        up_map = lambda i, k: (0, k)

    # Advisory cost estimate so XLA schedules neighbors sensibly.
    cost = pl.CostEstimate(
        flops=6 * S * H * I,                         # gate + up + down matmuls
        transcendentals=S * I,                       # sigmoid -> exp
        bytes_accessed=3 * H * I_eff * 2 * n_i + 2 * S * H * 2,
    )

    out = pl.pallas_call(
        _mlp_kernel,
        out_shape=jax.ShapeDtypeStruct((S, H), jnp.bfloat16),
        grid_spec=pltpu.PrefetchScalarGridSpec(
            num_scalar_prefetch=0,
            grid=grid,
            in_specs=[
                pl.BlockSpec((ts, H), lambda i, k: (i, 0)),   # x tile
                pl.BlockSpec((H, ti), lambda i, k: (0, k)),   # gate weight tile
                pl.BlockSpec((H, ti), up_map),                # up weight tile
                pl.BlockSpec((ti, H), lambda i, k: (k, 0)),   # down weight tile
            ],
            out_specs=pl.BlockSpec((ts, H), lambda i, k: (i, 0)),
            scratch_shapes=[pltpu.VMEM((ts, H), jnp.float32)],
        ),
        compiler_params=pltpu.CompilerParams(
            dimension_semantics=("parallel", "arbitrary"),
            vmem_limit_bytes=vmem_limit,
        ),
        cost_estimate=cost,
    )(x2d, wg_arr, wu_arr, wd_arr)

    return out


# --------------------------------------------------------------------------
# Reference + test
# --------------------------------------------------------------------------
def _reference(x, w_gate_up, w_down):
    x2d = x[0].astype(jnp.float32)
    I = w_down.shape[0]
    c0 = x2d @ w_gate_up.astype(jnp.float32)
    gate, up = c0[:, :I], c0[:, I:]
    h = gate * jax.nn.sigmoid(gate) * up
    out = h @ w_down.astype(jnp.float32)
    return out.astype(jnp.bfloat16)


if __name__ == "__main__":
    # Small, forward-consistent shapes: batch=1, seq=8, hidden=128, intermediate=256.
    S, H, I = 8, 128, 256

    key = jax.random.PRNGKey(0)
    kx, kg, ku, kd = jax.random.split(key, 4)

    x = (jax.random.normal(kx, (1, S, H), dtype=jnp.float32) * 0.5).astype(jnp.bfloat16)

    # Deterministic synthetic weights (merged gate||up as in merge_gate_up_w4abf16).
    w_gate = (jax.random.normal(kg, (H, I), dtype=jnp.float32) * 0.1).astype(jnp.bfloat16)
    w_up = (jax.random.normal(ku, (H, I), dtype=jnp.float32) * 0.1).astype(jnp.bfloat16)
    w_gate_up = jnp.concatenate([w_gate, w_up], axis=1)          # [H, 2*I]
    w_down = (jax.random.normal(kd, (I, H), dtype=jnp.float32) * 0.05).astype(jnp.bfloat16)

    out = llama_fast_mlp(x, w_gate_up, w_down)
    out = jax.block_until_ready(out)

    ref = _reference(x, w_gate_up, w_down)
    assert out.shape == (S, H) and out.dtype == jnp.bfloat16
    err = jnp.max(jnp.abs(out.astype(jnp.float32) - ref.astype(jnp.float32)))
    assert float(err) < 5e-2, f"max abs err {err}"

    print("KERNEL_OK")
</pallas_src>

<mosaic_0001>
module attributes {stable_mosaic.version = 11 : i64} {
  func.func @_mlp_kernel(%arg0: i32, %arg1: i32, %arg2: memref<8x128xbf16, #tpu.memory_space<vmem>>, %arg3: memref<128x256xbf16, #tpu.memory_space<vmem>>, %arg4: memref<128x256xbf16, #tpu.memory_space<vmem>>, %arg5: memref<256x128xbf16, #tpu.memory_space<vmem>>, %arg6: memref<8x128xbf16, #tpu.memory_space<vmem>>, %arg7: memref<8x128xf32, #tpu.memory_space<vmem>>) attributes {dimension_semantics = [#tpu.dimension_semantics<parallel>, #tpu.dimension_semantics<arbitrary>], iteration_bounds = array<i64: 1, 1>, scalar_prefetch = 0 : i64, scratch_operands = 1 : i64, tpu.core_type = #tpu.core_type<tc>, window_params = [{transform_indices = @transform_0, window_bounds = array<i64: 8, 128>}, {transform_indices = @transform_1, window_bounds = array<i64: 128, 256>}, {transform_indices = @transform_2, window_bounds = array<i64: 128, 256>}, {transform_indices = @transform_3, window_bounds = array<i64: 256, 128>}, {transform_indices = @transform_4, window_bounds = array<i64: 8, 128>}]} {
    %c0_i32 = arith.constant 0 : i32
    %0 = arith.cmpi eq, %arg1, %c0_i32 : i32
    %1 = arith.extui %0 : i1 to i32
    %c0_i32_0 = arith.constant 0 : i32
    %2 = arith.cmpi ne, %1, %c0_i32_0 : i32
    scf.if %2 {
      %cst_17 = arith.constant 0.000000e+00 : f32
      %24 = vector.broadcast %cst_17 : f32 to vector<8x128xf32>
      %c0_18 = arith.constant 0 : index
      %c0_19 = arith.constant 0 : index
      %25 = vector.load %arg7[%c0_18, %c0_19] : memref<8x128xf32, #tpu.memory_space<vmem>>, vector<8x128xf32>
      tpu.vector_store %arg7[%c0_18, %c0_19], %24 {strides = array<i32>} : memref<8x128xf32, #tpu.memory_space<vmem>>, vector<8x128xf32>,
    } else {
    }
    %c0 = arith.constant 0 : index
    %c0_1 = arith.constant 0 : index
    %3 = vector.load %arg2[%c0, %c0_1] : memref<8x128xbf16, #tpu.memory_space<vmem>>, vector<8x128xbf16>
    %c0_2 = arith.constant 0 : index
    %c0_3 = arith.constant 0 : index
    %4 = vector.load %arg3[%c0_2, %c0_3] : memref<128x256xbf16, #tpu.memory_space<vmem>>, vector<128x256xbf16>
    %cst = arith.constant dense<0.000000e+00> : vector<8x256xf32>
    %5 = tpu.matmul %3, %4, %cst {dimension_numbers = #tpu.dot_dimension_numbers<[1], [0], [0], [1], [0, 0, 1, 1], [], []>} : vector<8x128xbf16>, vector<128x256xbf16>, vector<8x256xf32> -> vector<8x256xf32>
    %c0_4 = arith.constant 0 : index
    %c0_5 = arith.constant 0 : index
    %6 = vector.load %arg4[%c0_4, %c0_5] : memref<128x256xbf16, #tpu.memory_space<vmem>>, vector<128x256xbf16>
    %cst_6 = arith.constant dense<0.000000e+00> : vector<8x256xf32>
    %7 = tpu.matmul %3, %6, %cst_6 {dimension_numbers = #tpu.dot_dimension_numbers<[1], [0], [0], [1], [0, 0, 1, 1], [], []>} : vector<8x128xbf16>, vector<128x256xbf16>, vector<8x256xf32> -> vector<8x256xf32>
    %8 = arith.negf %5 : vector<8x256xf32>
    %9 = math.exp %8 : vector<8x256xf32>
    %cst_7 = arith.constant 1.000000e+00 : f32
    %10 = vector.broadcast %cst_7 : f32 to vector<8x256xf32>
    %11 = arith.addf %10, %9 : vector<8x256xf32>
    %12 = arith.divf %10, %11 : vector<8x256xf32>
    %13 = arith.mulf %5, %12 : vector<8x256xf32>
    %14 = arith.mulf %13, %7 : vector<8x256xf32>
    %15 = arith.truncf %14 : vector<8x256xf32> to vector<8x256xbf16>
    %c0_8 = arith.constant 0 : index
    %c0_9 = arith.constant 0 : index
    %16 = vector.load %arg7[%c0_8, %c0_9] : memref<8x128xf32, #tpu.memory_space<vmem>>, vector<8x128xf32>
    %c0_10 = arith.constant 0 : index
    %c0_11 = arith.constant 0 : index
    %17 = vector.load %arg5[%c0_10, %c0_11] : memref<256x128xbf16, #tpu.memory_space<vmem>>, vector<256x128xbf16>
    %cst_12 = arith.constant dense<0.000000e+00> : vector<8x128xf32>
    %18 = tpu.matmul %15, %17, %cst_12 {dimension_numbers = #tpu.dot_dimension_numbers<[1], [0], [0], [1], [0, 0, 1, 1], [], []>} : vector<8x256xbf16>, vector<256x128xbf16>, vector<8x128xf32> -> vector<8x128xf32>
    %19 = arith.addf %16, %18 : vector<8x128xf32>
    %c0_13 = arith.constant 0 : index
    %c0_14 = arith.constant 0 : index
    %20 = vector.load %arg7[%c0_13, %c0_14] : memref<8x128xf32, #tpu.memory_space<vmem>>, vector<8x128xf32>
    tpu.vector_store %arg7[%c0_13, %c0_14], %19 {strides = array<i32>} : memref<8x128xf32, #tpu.memory_space<vmem>>, vector<8x128xf32>,
    %c0_i32_15 = arith.constant 0 : i32
    %21 = arith.cmpi eq, %arg1, %c0_i32_15 : i32
    %22 = arith.extui %21 : i1 to i32
    %c0_i32_16 = arith.constant 0 : i32
    %23 = arith.cmpi ne, %22, %c0_i32_16 : i32
    scf.if %23 {
      %c0_17 = arith.constant 0 : index
      %c0_18 = arith.constant 0 : index
      %24 = vector.load %arg7[%c0_17, %c0_18] : memref<8x128xf32, #tpu.memory_space<vmem>>, vector<8x128xf32>
      %25 = arith.truncf %24 : vector<8x128xf32> to vector<8x128xbf16>
      %c0_19 = arith.constant 0 : index
      %c0_20 = arith.constant 0 : index
      %26 = vector.load %arg6[%c0_19, %c0_20] : memref<8x128xbf16, #tpu.memory_space<vmem>>, vector<8x128xbf16>
      tpu.vector_store %arg6[%c0_19, %c0_20], %25 {strides = array<i32>} : memref<8x128xbf16, #tpu.memory_space<vmem>>, vector<8x128xbf16>,
    } else {
    }
    return
  }
  func.func @transform_0(%arg0: i32, %arg1: i32) -> (i32, i32) {
    %c0_i32 = arith.constant 0 : i32
    %c0_i32_0 = arith.constant 0 : i32
    return %arg0, %c0_i32 : i32, i32
  }
  func.func @transform_1(%arg0: i32, %arg1: i32) -> (i32, i32) {
    %c0_i32 = arith.constant 0 : i32
    %c0_i32_0 = arith.constant 0 : i32
    return %c0_i32, %arg1 : i32, i32
  }
  func.func @transform_2(%arg0: i32, %arg1: i32) -> (i32, i32) {
    %c1_i32 = arith.constant 1 : i32
    %0 = arith.addi %arg1, %c1_i32 : i32
    %c0_i32 = arith.constant 0 : i32
    %c0_i32_0 = arith.constant 0 : i32
    return %c0_i32, %0 : i32, i32
  }
  func.func @transform_3(%arg0: i32, %arg1: i32) -> (i32, i32) {
    %c0_i32 = arith.constant 0 : i32
    %c0_i32_0 = arith.constant 0 : i32
    return %arg1, %c0_i32 : i32, i32
  }
  func.func @transform_4(%arg0: i32, %arg1: i32) -> (i32, i32) {
    %c0_i32 = arith.constant 0 : i32
    %c0_i32_0 = arith.constant 0 : i32
    return %arg0, %c0_i32 : i32, i32
  }
}

</mosaic_0001>

<llo_original>
// kernel: tpu_custom_call.1
$region0: #{tpu_custom_call.1}
  #allocation0 [shape = 'u32[]', space=smem, size = 0x4, offset = 0x4, fixed_abs, tag = 'smem constant byte address 0x4 - core index']
  #allocation1 [shape = 'u32[72,128]{1,0:T(1,128)}', space=vmem, size = 0x9000, scoped, tag = 'internal scratch']
  #allocation2 [shape = 'f32[8,128]{1,0:T(8,128)}', space=vmem, size = 0x1000, scoped, tag = 'scratch operand']
  %s0 = inlined_call_operand.hbm [shape: bf16[8,128], index: 0, kind: input, shape index: {}]
  %s1 = inlined_call_operand.hbm [shape: bf16[128,512], index: 1, kind: input, shape index: {}]
  %s2 = inlined_call_operand.hbm [shape: bf16[128,512], index: 2, kind: input, shape index: {}]
  %s3 = inlined_call_operand.hbm [shape: bf16[256,128], index: 3, kind: input, shape index: {}]
  %s4 = inlined_call_operand.hbm [shape: bf16[8,128], index: 4, kind: output, shape index: {}]
  %s5 = sld [smem:[#allocation0]]
  $region50: #{tpu_custom_call.1} parent=0
    _
  %s7 = ssub.s32 1, %s5
  %s8 = scalar_select 0, %s7, %s5
  $region1: #{tpu_custom_call.1} parent=0
    #allocation3 [shape = 'u8[2048]{0}', space=vmem, size = 0x800, scoped, tag = 'input window, operand 0, single buffered']
    #allocation4 [shape = 's32[1]{0}', space=sflag, size = 0x4, scoped, tag = 'scoped memory for tpu_custom_call.1']
    #allocation5 [shape = 's32[1]{0}', space=sflag, size = 0x4, scoped, tag = 'scoped memory for tpu_custom_call.1']
    #allocation6 [shape = 'u8[65536]{0}', space=vmem, size = 0x10000, scoped, tag = 'input window, operand 1, single buffered']
    #allocation7 [shape = 's32[1]{0}', space=sflag, size = 0x4, scoped, tag = 'scoped memory for tpu_custom_call.1']
    #allocation8 [shape = 'u8[65536]{0}', space=vmem, size = 0x10000, scoped, tag = 'input window, operand 2, single buffered']
    #allocation9 [shape = 'u8[65536]{0}', space=vmem, size = 0x10000, scoped, tag = 'input window, operand 3, single buffered']
    #allocation10 [shape = 's32[1]{0}', space=sflag, size = 0x4, scoped, tag = 'scoped memory for tpu_custom_call.1']
    #allocation11 [shape = 'u8[2048]{0}', space=vmem, size = 0x800, scoped, tag = 'output window, operand 0, single buffered']
    %9 = vsyncpa [#allocation4], 0
    %10 = vsyncpa [#allocation7], 0
    %11 = vsyncpa [#allocation10], 0
    %12 = vsyncpa [#allocation5], 0
    // Predicated region
    $region2: #{tpu_custom_call.1} parent=1 // pred_check
      _
    $region3: #{tpu_custom_call.1} parent=1 // pred_check_branch
      %14 = sbr.rel (0) target = $region5
    $region4: #{tpu_custom_call.1} parent=1 // pred_region
      %16 = vsyncadd [#allocation4], 0
      %s18 = sshll.u32 %s0, 4
      %s19 = int_to_ptr.hbm [resolvable:$true] %s18
      %s20 = sshll.u32 [#allocation3], 4
      %s21 = int_to_ptr.vmem [resolvable:$true] %s20
      %23 = dma.hbm_to_vmem [thread:$0]  %s19, 64, %s21, [#allocation4]
    $region5: #{tpu_custom_call.1} parent=1 // pred_fallthru
      _
    // Predicated region
    $region6: #{tpu_custom_call.1} parent=1 // pred_check
      _
    $region7: #{tpu_custom_call.1} parent=1 // pred_check_branch
      %25 = sbr.rel (0) target = $region9
    $region8: #{tpu_custom_call.1} parent=1 // pred_region
      %27 = vsyncadd [#allocation7], 0
      %s28 = sshll.u32 %s1, 4
      %s29 = int_to_ptr.hbm [resolvable:$true] %s28
      %s30 = sshll.u32 [#allocation6], 4
      %s31 = int_to_ptr.vmem [resolvable:$true] %s30
      %36 = dma.hbm_to_vmem [thread:$0]  %s29, 2048, %s31, [#allocation7], 256, 128, 8
    $region9: #{tpu_custom_call.1} parent=1 // pred_fallthru
      _
    // Predicated region
    $region10: #{tpu_custom_call.1} parent=1 // pred_check
      _
    $region11: #{tpu_custom_call.1} parent=1 // pred_check_branch
      %38 = sbr.rel (0) target = $region13
    $region12: #{tpu_custom_call.1} parent=1 // pred_region
      %s39 = sadd.s32 0, 1
      %s40 = smul.u32 2, %s39
      %42 = vsyncadd [#allocation7], 0
      %s43 = smul.addr %s40, 4
      %s44 = scalar_lea.hbm %s2, %s43
      %s45 = sshll.u32 %s44, 4
      %s46 = int_to_ptr.hbm [resolvable:$true] %s45
      %s47 = sshll.u32 [#allocation8], 4
      %s48 = int_to_ptr.vmem [resolvable:$true] %s47
      %53 = dma.hbm_to_vmem [thread:$0]  %s46, 2048, %s48, [#allocation7], 256, 128, 8
    $region13: #{tpu_custom_call.1} parent=1 // pred_fallthru
      _
    // Predicated region
    $region14: #{tpu_custom_call.1} parent=1 // pred_check
      _
    $region15: #{tpu_custom_call.1} parent=1 // pred_check_branch
      %55 = sbr.rel (0) target = $region17
    $region16: #{tpu_custom_call.1} parent=1 // pred_region
      %57 = vsyncadd [#allocation10], 0
      %s58 = sshll.u32 %s3, 4
      %s59 = int_to_ptr.hbm [resolvable:$true] %s58
      %s60 = sshll.u32 [#allocation9], 4
      %s61 = int_to_ptr.vmem [resolvable:$true] %s60
      %66 = dma.hbm_to_vmem [thread:$0]  %s59, 2048, %s61, [#allocation10], 64, 64, 4
    $region17: #{tpu_custom_call.1} parent=1 // pred_fallthru
      _
    // Predicated region
    $region18: #{tpu_custom_call.1} parent=1 // pred_check
      _
    $region19: #{tpu_custom_call.1} parent=1 // pred_check_branch
      %68 = sbr.rel (0) target = $region21
    $region20: #{tpu_custom_call.1} parent=1 // pred_region
      %70 = dma.done [#allocation4], 64
    $region21: #{tpu_custom_call.1} parent=1 // pred_fallthru
      _
    // Predicated region
    $region22: #{tpu_custom_call.1} parent=1 // pred_check
      _
    $region23: #{tpu_custom_call.1} parent=1 // pred_check_branch
      %72 = sbr.rel (0) target = $region25
    $region24: #{tpu_custom_call.1} parent=1 // pred_region
      %74 = dma.done [#allocation7], 2048
    $region25: #{tpu_custom_call.1} parent=1 // pred_fallthru
      _
    // Predicated region
    $region26: #{tpu_custom_call.1} parent=1 // pred_check
      _
    $region27: #{tpu_custom_call.1} parent=1 // pred_check_branch
      %76 = sbr.rel (0) target = $region29
    $region28: #{tpu_custom_call.1} parent=1 // pred_region
      %78 = dma.done [#allocation7], 2048
    $region29: #{tpu_custom_call.1} parent=1 // pred_fallthru
      _
    // Predicated region
    $region30: #{tpu_custom_call.1} parent=1 // pred_check
      _
    $region31: #{tpu_custom_call.1} parent=1 // pred_check_branch
      %80 = sbr.rel (0) target = $region33
    $region32: #{tpu_custom_call.1} parent=1 // pred_region
      %82 = dma.done [#allocation10], 2048
    $region33: #{tpu_custom_call.1} parent=1 // pred_fallthru
      _
    %s83 = sadd.s32 0, 1
    %s84 = smul.u32 2, %s83
    %p85 = scmp.eq.s32.totalorder 0, 0
    // Predicated region
    $region34: #{tpu_custom_call.1} parent=1 // pred_check
      %p86 = pneg %p85
    $region35: #{tpu_custom_call.1} parent=1 // pred_check_branch
      %88 = sbr.rel (%p86) target = $region37
    $region36: #{tpu_custom_call.1} parent=1 // pred_region
      %89 = vst [vmem:[#allocation2] sm:$0xff] 0.0
    $region37: #{tpu_custom_call.1} parent=1 // pred_fallthru
      _
    %v90 = vld [vmem:[#allocation3] sm:$0xf]
    %v91 = vld [vmem:[#allocation6] sm:$0xff]
    %v92 = vld [vmem:[#allocation6 + $0x8] sm:$0xff]
    %v93 = vld [vmem:[#allocation6 + $0x10] sm:$0xff]
    %v94 = vld [vmem:[#allocation6 + $0x18] sm:$0xff]
    %v95 = vld [vmem:[#allocation6 + $0x20] sm:$0xff]
    %v96 = vld [vmem:[#allocation6 + $0x28] sm:$0xff]
    %v97 = vld [vmem:[#allocation6 + $0x30] sm:$0xff]
    %v98 = vld [vmem:[#allocation6 + $0x38] sm:$0xff]
    %v99 = vld [vmem:[#allocation6 + $0x40] sm:$0xff]
    %v100 = vld [vmem:[#allocation6 + $0x48] sm:$0xff]
    %v101 = vld [vmem:[#allocation6 + $0x50] sm:$0xff]
    %v102 = vld [vmem:[#allocation6 + $0x58] sm:$0xff]
    %v103 = vld [vmem:[#allocation6 + $0x60] sm:$0xff]
    %v104 = vld [vmem:[#allocation6 + $0x68] sm:$0xff]
    %v105 = vld [vmem:[#allocation6 + $0x70] sm:$0xff]
    %v106 = vld [vmem:[#allocation6 + $0x78] sm:$0xff]
    %v123 = vunpack.c.l.b16 %v91
    %v124 = vunpack.c.h.b16 %v91
    %v125 = vunpack.c.l.b16 %v92
    %v126 = vunpack.c.h.b16 %v92
    %v127 = vunpack.c.l.b16 %v93
    %v128 = vunpack.c.h.b16 %v93
    %v129 = vunpack.c.l.b16 %v94
    %v130 = vunpack.c.h.b16 %v94
    %v131 = vunpack.c.l.b16 %v95
    %v132 = vunpack.c.h.b16 %v95
    %v133 = vunpack.c.l.b16 %v96
    %v134 = vunpack.c.h.b16 %v96
    %v135 = vunpack.c.l.b16 %v97
    %v136 = vunpack.c.h.b16 %v97
    %v137 = vunpack.c.l.b16 %v98
    %v138 = vunpack.c.h.b16 %v98
    %v139 = vunpack.c.l.b16 %v99
    %v140 = vunpack.c.h.b16 %v99
    %v141 = vunpack.c.l.b16 %v100
    %v142 = vunpack.c.h.b16 %v100
    %v143 = vunpack.c.l.b16 %v101
    %v144 = vunpack.c.h.b16 %v101
    %v145 = vunpack.c.l.b16 %v102
    %v146 = vunpack.c.h.b16 %v102
    %v147 = vunpack.c.l.b16 %v103
    %v148 = vunpack.c.h.b16 %v103
    %v149 = vunpack.c.l.b16 %v104
    %v150 = vunpack.c.h.b16 %v104
    %v151 = vunpack.c.l.b16 %v105
    %v152 = vunpack.c.h.b16 %v105
    %v153 = vunpack.c.l.b16 %v106
    %v154 = vunpack.c.h.b16 %v106
    %v155 = vpack.c.b16 %v125, %v123
    %v156 = vpack.c.b16 %v126, %v124
    %v157 = vpack.c.b16 %v129, %v127
    %v158 = vpack.c.b16 %v130, %v128
    %v159 = vpack.c.b16 %v133, %v131
    %v160 = vpack.c.b16 %v134, %v132
    %v161 = vpack.c.b16 %v137, %v135
    %v162 = vpack.c.b16 %v138, %v136
    %v163 = vpack.c.b16 %v141, %v139
    %v164 = vpack.c.b16 %v142, %v140
    %v165 = vpack.c.b16 %v145, %v143
    %v166 = vpack.c.b16 %v146, %v144
    %v167 = vpack.c.b16 %v149, %v147
    %v168 = vpack.c.b16 %v150, %v148
    %v169 = vpack.c.b16 %v153, %v151
    %v170 = vpack.c.b16 %v154, %v152
    %187 = vmatpush.bf16.msra.mxu0 %v169
    %188 = vmatpush.bf16.msra.mxu0 %v167
    %189 = vmatpush.bf16.msra.mxu0 %v165
    %190 = vmatpush.bf16.msra.mxu0 %v163
    %191 = vmatpush.bf16.msra.mxu0 %v161
    %192 = vmatpush.bf16.msra.mxu0 %v159
    %193 = vmatpush.bf16.msra.mxu0 %v157
    %194 = vmatpush.bf16.msra.mxu0 %v155
    %195 = vmatmul.bf16.gmra.mxu0 %v90
    %v196 = vpop.f32.mrf.mxu0
    %v197 = vadd.f32 0.0, %v196
    %v198 = vpop.f32.mrf.mxu0
    %199 = vdwg.mxu0
    %200 = vmatpush.bf16.msra.mxu0 %v170
    %201 = vmatpush.bf16.msra.mxu0 %v168
    %202 = vmatpush.bf16.msra.mxu0 %v166
    %203 = vmatpush.bf16.msra.mxu0 %v164
    %204 = vmatpush.bf16.msra.mxu0 %v162
    %205 = vmatpush.bf16.msra.mxu0 %v160
    %206 = vmatpush.bf16.msra.mxu0 %v158
    %207 = vmatpush.bf16.msra.mxu0 %v156
    %208 = vmatmul.bf16.gmra.mxu0 %v90
    %v209 = vpop.f32.mrf.mxu0
    %v210 = vadd.f32 0.0, %v209
    %v211 = vpop.f32.mrf.mxu0
    %212 = vdwg.mxu0
    %v213 = vld [vmem:[#allocation8] sm:$0xff]
    %v214 = vld [vmem:[#allocation8 + $0x8] sm:$0xff]
    %v215 = vld [vmem:[#allocation8 + $0x10] sm:$0xff]
    %v216 = vld [vmem:[#allocation8 + $0x18] sm:$0xff]
    %v217 = vld [vmem:[#allocation8 + $0x20] sm:$0xff]
    %v218 = vld [vmem:[#allocation8 + $0x28] sm:$0xff]
    %v219 = vld [vmem:[#allocation8 + $0x30] sm:$0xff]
    %v220 = vld [vmem:[#allocation8 + $0x38] sm:$0xff]
    %v221 = vld [vmem:[#allocation8 + $0x40] sm:$0xff]
    %v222 = vld [vmem:[#allocation8 + $0x48] sm:$0xff]
    %v223 = vld [vmem:[#allocation8 + $0x50] sm:$0xff]
    %v224 = vld [vmem:[#allocation8 + $0x58] sm:$0xff]
    %v225 = vld [vmem:[#allocation8 + $0x60] sm:$0xff]
    %v226 = vld [vmem:[#allocation8 + $0x68] sm:$0xff]
    %v227 = vld [vmem:[#allocation8 + $0x70] sm:$0xff]
    %v228 = vld [vmem:[#allocation8 + $0x78] sm:$0xff]
    %v245 = vunpack.c.l.b16 %v213
    %v246 = vunpack.c.h.b16 %v213
    %v247 = vunpack.c.l.b16 %v214
    %v248 = vunpack.c.h.b16 %v214
    %v249 = vunpack.c.l.b16 %v215
    %v250 = vunpack.c.h.b16 %v215
    %v251 = vunpack.c.l.b16 %v216
    %v252 = vunpack.c.h.b16 %v216
    %v253 = vunpack.c.l.b16 %v217
    %v254 = vunpack.c.h.b16 %v217
    %v255 = vunpack.c.l.b16 %v218
    %v256 = vunpack.c.h.b16 %v218
    %v257 = vunpack.c.l.b16 %v219
    %v258 = vunpack.c.h.b16 %v219
    %v259 = vunpack.c.l.b16 %v220
    %v260 = vunpack.c.h.b16 %v220
    %v261 = vunpack.c.l.b16 %v221
    %v262 = vunpack.c.h.b16 %v221
    %v263 = vunpack.c.l.b16 %v222
    %v264 = vunpack.c.h.b16 %v222
    %v265 = vunpack.c.l.b16 %v223
    %v266 = vunpack.c.h.b16 %v223
    %v267 = vunpack.c.l.b16 %v224
    %v268 = vunpack.c.h.b16 %v224
    %v269 = vunpack.c.l.b16 %v225
    %v270 = vunpack.c.h.b16 %v225
    %v271 = vunpack.c.l.b16 %v226
    %v272 = vunpack.c.h.b16 %v226
    %v273 = vunpack.c.l.b16 %v227
    %v274 = vunpack.c.h.b16 %v227
    %v275 = vunpack.c.l.b16 %v228
    %v276 = vunpack.c.h.b16 %v228
    %v277 = vpack.c.b16 %v247, %v245
    %v278 = vpack.c.b16 %v248, %v246
    %v279 = vpack.c.b16 %v251, %v249
    %v280 = vpack.c.b16 %v252, %v250
    %v281 = vpack.c.b16 %v255, %v253
    %v282 = vpack.c.b16 %v256, %v254
    %v283 = vpack.c.b16 %v259, %v257
    %v284 = vpack.c.b16 %v260, %v258
    %v285 = vpack.c.b16 %v263, %v261
    %v286 = vpack.c.b16 %v264, %v262
    %v287 = vpack.c.b16 %v267, %v265
    %v288 = vpack.c.b16 %v268, %v266
    %v289 = vpack.c.b16 %v271, %v269
    %v290 = vpack.c.b16 %v272, %v270
    %v291 = vpack.c.b16 %v275, %v273
    %v292 = vpack.c.b16 %v276, %v274
    %309 = vmatpush.bf16.msra.mxu0 %v291
    %310 = vmatpush.bf16.msra.mxu0 %v289
    %311 = vmatpush.bf16.msra.mxu0 %v287
    %312 = vmatpush.bf16.msra.mxu0 %v285
    %313 = vmatpush.bf16.msra.mxu0 %v283
    %314 = vmatpush.bf16.msra.mxu0 %v281
    %315 = vmatpush.bf16.msra.mxu0 %v279
    %316 = vmatpush.bf16.msra.mxu0 %v277
    %317 = vmatmul.bf16.gmra.mxu0 %v90
    %v318 = vpop.f32.mrf.mxu0
    %v319 = vadd.f32 0.0, %v318
    %v320 = vpop.f32.mrf.mxu0
    %321 = vdwg.mxu0
    %322 = vmatpush.bf16.msra.mxu0 %v292
    %323 = vmatpush.bf16.msra.mxu0 %v290
    %324 = vmatpush.bf16.msra.mxu0 %v288
    %325 = vmatpush.bf16.msra.mxu0 %v286
    %326 = vmatpush.bf16.msra.mxu0 %v284
    %327 = vmatpush.bf16.msra.mxu0 %v282
    %328 = vmatpush.bf16.msra.mxu0 %v280
    %329 = vmatpush.bf16.msra.mxu0 %v278
    %330 = vmatmul.bf16.gmra.mxu0 %v90
    %v331 = vpop.f32.mrf.mxu0
    %v332 = vadd.f32 0.0, %v331
    %v333 = vpop.f32.mrf.mxu0
    %334 = vdwg.mxu0
    %v335 = vxor.u32 %v197, 2147483648
    %v336 = vxor.u32 %v210, 2147483648
    %v337 = vmul.f32 %v335, 1.442695
    %v338 = vpow.pop %v337
    %v339 = vmul.f32 %v336, 1.442695
    %v340 = vpow.pop %v339
    %v341 = vadd.f32 %v338, 1.0
    %v342 = vadd.f32 %v340, 1.0
    %v343 = vrcp.pop %v341
    %v344 = vmul.f32 %v341, %v343
    %v345 = vsub.f32 1.0, %v344
    %v346 = vmul.f32 %v343, %v345
    %v347 = vadd.f32 %v343, %v346
    %vm348 = vweird.f32 %v341
    %vm349 = vweird.f32 %v343
    %vm350 = vmor %vm348, %vm349
    %v351 = vsel %vm350, %v343, %v347
    %v352 = vand.u32 2147483647, %v341
    %vm353 = vcmp.eq.f32.partialorder %v352, 8.507059e+37
    %v354 = vand.u32 %v341, 2147483648
    %v355 = vor.u32 1.1754944e-38, %v354
    %v356 = vsel %vm353, %v355, %v351
    %v357 = vmul.f32 1.0, %v356
    %v358 = vrcp.pop %v342
    %v359 = vmul.f32 %v342, %v358
    %v360 = vsub.f32 1.0, %v359
    %v361 = vmul.f32 %v358, %v360
    %v362 = vadd.f32 %v358, %v361
    %vm363 = vweird.f32 %v342
    %vm364 = vweird.f32 %v358
    %vm365 = vmor %vm363, %vm364
    %v366 = vsel %vm365, %v358, %v362
    %v367 = vand.u32 2147483647, %v342
    %vm368 = vcmp.eq.f32.partialorder %v367, 8.507059e+37
    %v369 = vand.u32 %v342, 2147483648
    %v370 = vor.u32 1.1754944e-38, %v369
    %v371 = vsel %vm368, %v370, %v366
    %v372 = vmul.f32 1.0, %v371
    %v373 = vmul.f32 %v197, %v357
    %v374 = vmul.f32 %v210, %v372
    %v375 = vmul.f32 %v373, %v319
    %v376 = vmul.f32 %v374, %v332
    %v377 = vpack.c.bf16 %v375, %v375
    %v378 = vpack.c.bf16 %v376, %v376
    %v379 = vld [vmem:[#allocation2] sm:$0xff]
    %v380 = vld [vmem:[#allocation9] sm:$0xf]
    %v381 = vld [vmem:[#allocation9 + $0x4] sm:$0xf]
    %v382 = vld [vmem:[#allocation9 + $0x8] sm:$0xf]
    %v383 = vld [vmem:[#allocation9 + $0xc] sm:$0xf]
    %v384 = vld [vmem:[#allocation9 + $0x10] sm:$0xf]
    %v385 = vld [vmem:[#allocation9 + $0x14] sm:$0xf]
    %v386 = vld [vmem:[#allocation9 + $0x18] sm:$0xf]
    %v387 = vld [vmem:[#allocation9 + $0x1c] sm:$0xf]
    %v388 = vld [vmem:[#allocation9 + $0x20] sm:$0xf]
    %v389 = vld [vmem:[#allocation9 + $0x24] sm:$0xf]
    %v390 = vld [vmem:[#allocation9 + $0x28] sm:$0xf]
    %v391 = vld [vmem:[#allocation9 + $0x2c] sm:$0xf]
    %v392 = vld [vmem:[#allocation9 + $0x30] sm:$0xf]
    %v393 = vld [vmem:[#allocation9 + $0x34] sm:$0xf]
    %v394 = vld [vmem:[#allocation9 + $0x38] sm:$0xf]
    %v395 = vld [vmem:[#allocation9 + $0x3c] sm:$0xf]
    %v396 = vld [vmem:[#allocation9 + $0x40] sm:$0xf]
    %v397 = vld [vmem:[#allocation9 + $0x44] sm:$0xf]
    %v398 = vld [vmem:[#allocation9 + $0x48] sm:$0xf]
    %v399 = vld [vmem:[#allocation9 + $0x4c] sm:$0xf]
    %v400 = vld [vmem:[#allocation9 + $0x50] sm:$0xf]
    %v401 = vld [vmem:[#allocation9 + $0x54] sm:$0xf]
    %v402 = vld [vmem:[#allocation9 + $0x58] sm:$0xf]
    %v403 = vld [vmem:[#allocation9 + $0x5c] sm:$0xf]
    %v404 = vld [vmem:[#allocation9 + $0x60] sm:$0xf]
    %v405 = vld [vmem:[#allocation9 + $0x64] sm:$0xf]
    %v406 = vld [vmem:[#allocation9 + $0x68] sm:$0xf]
    %v407 = vld [vmem:[#allocation9 + $0x6c] sm:$0xf]
    %v408 = vld [vmem:[#allocation9 + $0x70] sm:$0xf]
    %v409 = vld [vmem:[#allocation9 + $0x74] sm:$0xf]
    %v410 = vld [vmem:[#allocation9 + $0x78] sm:$0xf]
    %v411 = vld [vmem:[#allocation9 + $0x7c] sm:$0xf]
    %v444 = vunpack.c.l.b16 %v380
    %v445 = vunpack.c.l.b16 %v381
    %v446 = vunpack.c.l.b16 %v382
    %v447 = vunpack.c.l.b16 %v383
    %v448 = vunpack.c.l.b16 %v384
    %v449 = vunpack.c.l.b16 %v385
    %v450 = vunpack.c.l.b16 %v386
    %v451 = vunpack.c.l.b16 %v387
    %v452 = vunpack.c.l.b16 %v388
    %v453 = vunpack.c.l.b16 %v389
    %v454 = vunpack.c.l.b16 %v390
    %v455 = vunpack.c.l.b16 %v391
    %v456 = vunpack.c.l.b16 %v392
    %v457 = vunpack.c.l.b16 %v393
    %v458 = vunpack.c.l.b16 %v394
    %v459 = vunpack.c.l.b16 %v395
    %v460 = vunpack.c.l.b16 %v396
    %v461 = vunpack.c.l.b16 %v397
    %v462 = vunpack.c.l.b16 %v398
    %v463 = vunpack.c.l.b16 %v399
    %v464 = vunpack.c.l.b16 %v400
    %v465 = vunpack.c.l.b16 %v401
    %v466 = vunpack.c.l.b16 %v402
    %v467 = vunpack.c.l.b16 %v403
    %v468 = vunpack.c.l.b16 %v404
    %v469 = vunpack.c.l.b16 %v405
    %v470 = vunpack.c.l.b16 %v406
    %v471 = vunpack.c.l.b16 %v407
    %v472 = vunpack.c.l.b16 %v408
    %v473 = vunpack.c.l.b16 %v409
    %v474 = vunpack.c.l.b16 %v410
    %v475 = vunpack.c.l.b16 %v411
    %v476 = vpack.c.b16 %v445, %v444
    %v477 = vpack.c.b16 %v447, %v446
    %v478 = vpack.c.b16 %v449, %v448
    %v479 = vpack.c.b16 %v451, %v450
    %v480 = vpack.c.b16 %v453, %v452
    %v481 = vpack.c.b16 %v455, %v454
    %v482 = vpack.c.b16 %v457, %v456
    %v483 = vpack.c.b16 %v459, %v458
    %v484 = vpack.c.b16 %v461, %v460
    %v485 = vpack.c.b16 %v463, %v462
    %v486 = vpack.c.b16 %v465, %v464
    %v487 = vpack.c.b16 %v467, %v466
    %v488 = vpack.c.b16 %v469, %v468
    %v489 = vpack.c.b16 %v471, %v470
    %v490 = vpack.c.b16 %v473, %v472
    %v491 = vpack.c.b16 %v475, %v474
    %508 = vmatpush.bf16.msra.mxu0 %v483
    %509 = vmatpush.bf16.msra.mxu0 %v482
    %510 = vmatpush.bf16.msra.mxu0 %v481
    %511 = vmatpush.bf16.msra.mxu0 %v480
    %512 = vmatpush.bf16.msra.mxu0 %v479
    %513 = vmatpush.bf16.msra.mxu0 %v478
    %514 = vmatpush.bf16.msra.mxu0 %v477
    %515 = vmatpush.bf16.msra.mxu0 %v476
    %516 = vmatmul.bf16.gmra.mxu0 %v377
    %v517 = vpop.f32.mrf.mxu0
    %v518 = vadd.f32 0.0, %v517
    %v519 = vpop.f32.mrf.mxu0
    %520 = vdwg.mxu0
    %521 = vmatpush.bf16.msra.mxu0 %v491
    %522 = vmatpush.bf16.msra.mxu0 %v490
    %523 = vmatpush.bf16.msra.mxu0 %v489
    %524 = vmatpush.bf16.msra.mxu0 %v488
    %525 = vmatpush.bf16.msra.mxu0 %v487
    %526 = vmatpush.bf16.msra.mxu0 %v486
    %527 = vmatpush.bf16.msra.mxu0 %v485
    %528 = vmatpush.bf16.msra.mxu0 %v484
    %529 = vmatmul.bf16.gmra.mxu0 %v378
    %v530 = vpop.f32.mrf.mxu0
    %v531 = vadd.f32 %v518, %v530
    %v532 = vpop.f32.mrf.mxu0
    %533 = vdwg.mxu0
    %v534 = vadd.f32 %v379, %v531
    %535 = vst [vmem:[#allocation2] sm:$0xff] %v534
    // Predicated region
    $region38: #{tpu_custom_call.1} parent=1 // pred_check
      %p536 = pneg %p85
    $region39: #{tpu_custom_call.1} parent=1 // pred_check_branch
      %538 = sbr.rel (%p536) target = $region41
    $region40: #{tpu_custom_call.1} parent=1 // pred_region
      %v539 = vld [vmem:[#allocation2] sm:$0xff]
      %v540 = vpack.c.bf16 %v539, %v539
      %541 = vst [vmem:[#allocation11] sm:$0xf] %v540
    $region41: #{tpu_custom_call.1} parent=1 // pred_fallthru
      _
    // Predicated region
    $region42: #{tpu_custom_call.1} parent=1 // pred_check
      _
    $region43: #{tpu_custom_call.1} parent=1 // pred_check_branch
      %543 = sbr.rel (0) target = $region45
    $region44: #{tpu_custom_call.1} parent=1 // pred_region
      %545 = vsyncadd [#allocation5], 0
      %s547 = sshll.u32 [#allocation11], 4
      %s548 = int_to_ptr.vmem [resolvable:$true] %s547
      %s549 = sshll.u32 %s4, 4
      %s550 = int_to_ptr.hbm [resolvable:$true] %s549
      %552 = dma.vmem_to_hbm [thread:$0]  %s548, 64, %s550, [#allocation5]
    $region45: #{tpu_custom_call.1} parent=1 // pred_fallthru
      _
    // Predicated region
    $region46: #{tpu_custom_call.1} parent=1 // pred_check
      _
    $region47: #{tpu_custom_call.1} parent=1 // pred_check_branch
      %554 = sbr.rel (0) target = $region49
    $region48: #{tpu_custom_call.1} parent=1 // pred_region
      %556 = dma.done [#allocation5], 64
    $region49: #{tpu_custom_call.1} parent=1 // pred_fallthru
      _
    %557 = vsyncpa [#allocation4], 1
    %558 = vsyncpa [#allocation7], 1
    %559 = vsyncpa [#allocation10], 1
    %560 = vsyncpa [#allocation5], 1

</llo_original>
